<compile_context>
chip_gen: v7x
topology: tpu7x:2x2x1
jax: 0.10.0
libtpu: 0.0.40
codegen_flags: <defaults>
</compile_context>

<pallas_src>
import functools

import jax
import jax.numpy as jnp
from jax import lax
from jax.experimental import pallas as pl
from jax.experimental.pallas import tpu as pltpu


# ----------------------------------------------------------------------------
# Pallas kernel: fused SRP hash + sketch gather + aggregation (one batch tile)
# ----------------------------------------------------------------------------
def _sketch_fwd_kernel(x_ref, wt_ref, p2_ref, s2_ref, o_ref, *, C, OUT):
    """SketchNetwork forward on one (TN, d) batch tile.

    x_ref  (TN, d)        input rows (batch-tiled)
    wt_ref (d, R*K)       SRP hyperplanes, transposed        (grid-resident)
    p2_ref (R*K, R*C)     bf16 bit-pack & lane-replicate mat (grid-resident)
    s2_ref (R*C, OUT_P)   sketch * agg[r]/R as [r*C + c, out] (grid-resident)
    o_ref  (TN, OUT)      predictions, unpadded lane width
    """
    # 1) SRP projection (MXU).
    proj = jnp.dot(x_ref[...], wt_ref[...], preferred_element_type=jnp.float32)
    # 2) Sign bits in {0, 1}; bf16 is exact for these values.
    bits = jnp.where(proj > 0.0, 1.0, 0.0).astype(jnp.bfloat16)
    # 3) Pack K bits -> integer cell code per repetition r, replicated across
    #    the C flat lanes j = r*C + c of that repetition (bf16 MXU, exact:
    #    all values are small integers <= 2**K - 1).
    code = jnp.dot(bits, p2_ref[...], preferred_element_type=jnp.float32)
    # 4) One-hot over the 2**K cells of each repetition. cidx is regenerated
    #    in-kernel (iota & (C-1), C is a power of two) - free VPU filler, no DMA.
    rc = code.shape[-1]
    cidx = (lax.broadcasted_iota(jnp.int32, (1, rc), 1) & (C - 1)).astype(jnp.float32)
    weights = jnp.where(jnp.abs(code - cidx) < 0.5, 1.0, 0.0)
    # 5) Gather-as-matmul with the pre-scaled sketch (agg[r]/R already folded
    #    into s2, so this is an exact select-and-sum).
    res = jnp.dot(weights, s2_ref[...], preferred_element_type=jnp.float32)
    # Store only the valid OUT lanes (no padded HBM writeback).
    o_ref[...] = res[:, :OUT]


# ----------------------------------------------------------------------------
# One-time parameter / constant formatting (outside the jitted forward)
# ----------------------------------------------------------------------------
def prepare_params(params, *, K, R, OUT, aggregation="avg", dropout_rate=0.0):
    """Layout glue done once per parameter update, not per forward call."""
    C = 2 ** K
    RK, RC = R * K, R * C
    out_pad = ((OUT + 127) // 128) * 128

    # SRP hyperplanes, transposed once for the (N,d) @ (d,RK) projection.
    wt = jnp.asarray(params["hash_w"], jnp.float32).T                 # (d, RK)

    # Constant bit-pack/replicate matrix P2[r*K + k, r*C + c] = 2**k
    # (block-diagonal over repetitions). bf16 is exact for these values.
    col_r = jnp.arange(RC, dtype=jnp.int32) // C
    row_r = jnp.arange(RK, dtype=jnp.int32) // K
    row_pow2 = (2 ** (jnp.arange(RK, dtype=jnp.int32) % K)).astype(jnp.float32)
    p2 = jnp.where(row_r[:, None] == col_r[None, :], row_pow2[:, None], 0.0)
    p2 = p2.astype(jnp.bfloat16)

    # Sketch table with agg[r]/R folded in, laid out as (R*C, OUT_pad) so the
    # gather is a single lane-dense MXU matmul against a {0,1} one-hot.
    sketch = jnp.asarray(params["sketch"], jnp.float32)               # (OUT, R, C)
    if dropout_rate > 0.0:
        # Eval-mode nn.Dropout is identity; the module multiplies by (1 - p)
        # explicitly afterwards, so that scaling is kept.
        sketch = sketch * (1.0 - dropout_rate)
    if aggregation == "linear":
        aggv = jnp.asarray(params["agg"], jnp.float32)
    else:  # 'avg'
        aggv = jnp.ones((R,), jnp.float32)
    sketch = sketch * (aggv / R)[None, :, None]
    s2 = jnp.transpose(sketch, (1, 2, 0)).reshape(RC, OUT)
    s2 = jnp.pad(s2, ((0, 0), (0, out_pad - OUT)))                    # (RC, out_pad)

    return {"wt": wt, "p2": p2, "s2": s2}


# ----------------------------------------------------------------------------
# Forward wrapper: batch-tiled, megacore-parallel pallas_call
# ----------------------------------------------------------------------------
def sketch_network_forward(x, prep, *, K, OUT, tile_n=512):
    n, d = x.shape
    wt, p2, s2 = prep["wt"], prep["p2"], prep["s2"]
    C = 2 ** K
    RK = wt.shape[1]
    RC, out_pad = s2.shape

    # Batch tile: biggest that fits comfortably; multiple of 8 (sublane rule).
    # NOTE: the dominant per-row VMEM intermediate is the (TN, R*2**K) one-hot;
    # for large K on v7x (64 MiB VMEM) cap tile_n accordingly or raise
    # vmem_limit_bytes in CompilerParams.
    tn = min(tile_n, n)
    if tn != n:
        tn = max(8, (tn // 8) * 8)
    grid = (pl.cdiv(n, tn),)

    kernel = functools.partial(_sketch_fwd_kernel, C=C, OUT=OUT)
    return pl.pallas_call(
        kernel,
        out_shape=jax.ShapeDtypeStruct((n, OUT), jnp.float32),
        grid=grid,
        in_specs=[
            pl.BlockSpec((tn, d), lambda i: (i, 0)),        # batch-tiled input
            pl.BlockSpec((d, RK), lambda i: (0, 0)),        # VMEM-resident params
            pl.BlockSpec((RK, RC), lambda i: (0, 0)),
            pl.BlockSpec((RC, out_pad), lambda i: (0, 0)),
        ],
        out_specs=pl.BlockSpec((tn, OUT), lambda i: (i, 0)),
        compiler_params=pltpu.CompilerParams(
            dimension_semantics=("parallel",)),             # 2-TC sharding on v7x
    )(x.astype(jnp.float32), wt, p2, s2)


# ----------------------------------------------------------------------------
# Parameter init (matches the module: sketch ~ N(0, 1e-4), agg = 1.0)
# ----------------------------------------------------------------------------
def init_params(key, *, K, R, d, OUT):
    k1, k2, k3 = jax.random.split(key, 3)
    # SRP hyperplanes: Rademacher +-1. Integer-valued planes (and integer demo
    # inputs) keep the hard sign threshold bit-exact across MXU precisions.
    hash_w = jnp.where(jax.random.bernoulli(k1, 0.5, (R * K, d)), 1.0, -1.0)
    hash_w = hash_w.astype(jnp.float32)
    sketch = 1e-4 * jax.random.normal(k2, (OUT, R, 2 ** K), jnp.float32)
    # Module inits agg to 1.0; perturb slightly so 'linear' aggregation is
    # actually exercised by the correctness check.
    agg = 1.0 + 0.05 * jax.random.normal(k3, (R,), jnp.float32)
    return {"hash_w": hash_w, "sketch": sketch, "agg": agg}


# ----------------------------------------------------------------------------
# Pure-JAX reference (gather-based, mirrors the torch forward)
# ----------------------------------------------------------------------------
def ref_forward(x, params, *, K, R, OUT, aggregation="avg", dropout_rate=0.0):
    n = x.shape[0]
    w = params["hash_w"]                                      # (R*K, d)
    proj = x @ w.T                                            # (N, R*K)
    bits = (proj > 0.0).astype(jnp.int32).reshape(n, R, K)
    code = jnp.sum(bits * (2 ** jnp.arange(K, dtype=jnp.int32)), axis=-1)  # (N, R)

    sketch = params["sketch"]
    if dropout_rate > 0.0:
        sketch = sketch * (1.0 - dropout_rate)
    idx = jnp.broadcast_to(code.T[None, :, :], (OUT, R, n))   # (OUT, R, N)
    alphas = jnp.take_along_axis(sketch, idx, axis=2)         # (OUT, R, N)
    alphas = jnp.transpose(alphas, (2, 0, 1))                 # (N, OUT, R)
    if aggregation == "linear":
        alphas = alphas * params["agg"]
    return jnp.mean(alphas, axis=2)


# ----------------------------------------------------------------------------
if __name__ == "__main__":
    K, R, d, OUT = 4, 16, 32, 10      # num_cel = 2**K = 16
    N = 256                            # small, but big enough to exercise tiling
    TILE_N = 128                       # -> grid=(2,), parallel axis
    aggregation = "linear"
    dropout_rate = 0.0

    key = jax.random.PRNGKey(0)
    kx, kp = jax.random.split(key)
    # Integer-valued inputs keep the sign-random-projection decision (a hard
    # threshold) identical between the Pallas kernel and the reference.
    x = jax.random.randint(kx, (N, d), -3, 4).astype(jnp.float32)
    params = init_params(kp, K=K, R=R, d=d, OUT=OUT)

    # Layout glue runs once, outside the jitted forward.
    prep = prepare_params(params, K=K, R=R, OUT=OUT,
                          aggregation=aggregation, dropout_rate=dropout_rate)

    fwd = jax.jit(functools.partial(
        sketch_network_forward, K=K, OUT=OUT, tile_n=TILE_N))
    out = jax.block_until_ready(fwd(x, prep))
    assert out.shape == (N, OUT), out.shape

    ref = ref_forward(x, params, K=K, R=R, OUT=OUT,
                      aggregation=aggregation, dropout_rate=dropout_rate)
    max_err = float(jnp.max(jnp.abs(out - ref)))
    assert bool(jnp.allclose(out, ref, atol=5e-6, rtol=5e-3)), (
        f"mismatch vs reference: max abs err = {max_err}")
    print("KERNEL_OK")
</pallas_src>

<mosaic_0001>
module attributes {stable_mosaic.version = 11 : i64} {
  func.func @_sketch_fwd_kernel(%arg0: i32, %arg1: memref<128x32xf32, #tpu.memory_space<vmem>>, %arg2: memref<32x64xf32, #tpu.memory_space<vmem>>, %arg3: memref<64x256xbf16, #tpu.memory_space<vmem>>, %arg4: memref<256x128xf32, #tpu.memory_space<vmem>>, %arg5: memref<128x10xf32, #tpu.memory_space<vmem>>) attributes {dimension_semantics = [#tpu.dimension_semantics<parallel>], iteration_bounds = array<i64: 2>, scalar_prefetch = 0 : i64, scratch_operands = 0 : i64, tpu.core_type = #tpu.core_type<tc>, window_params = [{transform_indices = @transform_0, window_bounds = array<i64: 128, 32>}, {pipeline_mode = #tpu.pipeline_mode<synchronous>, transform_indices = @transform_1, window_bounds = array<i64: 32, 64>}, {pipeline_mode = #tpu.pipeline_mode<synchronous>, transform_indices = @transform_2, window_bounds = array<i64: 64, 256>}, {pipeline_mode = #tpu.pipeline_mode<synchronous>, transform_indices = @transform_3, window_bounds = array<i64: 256, 128>}, {transform_indices = @transform_4, window_bounds = array<i64: 128, 10>}]} {
    %c0 = arith.constant 0 : index
    %c0_0 = arith.constant 0 : index
    %0 = vector.load %arg1[%c0, %c0_0] : memref<128x32xf32, #tpu.memory_space<vmem>>, vector<128x32xf32>
    %c0_1 = arith.constant 0 : index
    %c0_2 = arith.constant 0 : index
    %1 = vector.load %arg2[%c0_1, %c0_2] : memref<32x64xf32, #tpu.memory_space<vmem>>, vector<32x64xf32>
    %cst = arith.constant dense<0.000000e+00> : vector<128x64xf32>
    %2 = tpu.matmul %0, %1, %cst {dimension_numbers = #tpu.dot_dimension_numbers<[1], [0], [0], [1], [0, 0, 1, 1], [], []>} : vector<128x32xf32>, vector<32x64xf32>, vector<128x64xf32> -> vector<128x64xf32>
    %cst_3 = arith.constant 0.000000e+00 : f32
    %3 = vector.broadcast %cst_3 : f32 to vector<128x64xf32>
    %4 = arith.cmpf ogt, %2, %3 : vector<128x64xf32>
    %cst_4 = arith.constant 1.000000e+00 : f32
    %cst_5 = arith.constant 0.000000e+00 : f32
    %5 = vector.broadcast %cst_4 : f32 to vector<128x64xf32>
    %6 = vector.broadcast %cst_5 : f32 to vector<128x64xf32>
    %7 = arith.select %4, %5, %6 : vector<128x64xi1>, vector<128x64xf32>
    %8 = arith.truncf %7 : vector<128x64xf32> to vector<128x64xbf16>
    %c0_6 = arith.constant 0 : index
    %c0_7 = arith.constant 0 : index
    %9 = vector.load %arg3[%c0_6, %c0_7] : memref<64x256xbf16, #tpu.memory_space<vmem>>, vector<64x256xbf16>
    %cst_8 = arith.constant dense<0.000000e+00> : vector<128x256xf32>
    %10 = tpu.matmul %8, %9, %cst_8 {dimension_numbers = #tpu.dot_dimension_numbers<[1], [0], [0], [1], [0, 0, 1, 1], [], []>} : vector<128x64xbf16>, vector<64x256xbf16>, vector<128x256xf32> -> vector<128x256xf32>
    %11 = tpu.iota {dimensions = array<i32: 1>} : vector<1x256xi32>
    %c15_i32 = arith.constant 15 : i32
    %12 = vector.broadcast %c15_i32 : i32 to vector<1x256xi32>
    %13 = arith.andi %11, %12 : vector<1x256xi32>
    %14 = arith.sitofp %13 : vector<1x256xi32> to vector<1x256xf32>
    %15 = vector.broadcast %14 : vector<1x256xf32> to vector<128x256xf32>
    %16 = arith.subf %10, %15 : vector<128x256xf32>
    %17 = math.absf %16 : vector<128x256xf32>
    %cst_9 = arith.constant 5.000000e-01 : f32
    %18 = vector.broadcast %cst_9 : f32 to vector<128x256xf32>
    %19 = arith.cmpf olt, %17, %18 : vector<128x256xf32>
    %cst_10 = arith.constant 1.000000e+00 : f32
    %cst_11 = arith.constant 0.000000e+00 : f32
    %20 = vector.broadcast %cst_10 : f32 to vector<128x256xf32>
    %21 = vector.broadcast %cst_11 : f32 to vector<128x256xf32>
    %22 = arith.select %19, %20, %21 : vector<128x256xi1>, vector<128x256xf32>
    %c0_12 = arith.constant 0 : index
    %c0_13 = arith.constant 0 : index
    %23 = vector.load %arg4[%c0_12, %c0_13] : memref<256x128xf32, #tpu.memory_space<vmem>>, vector<256x128xf32>
    %cst_14 = arith.constant dense<0.000000e+00> : vector<128x128xf32>
    %24 = tpu.matmul %22, %23, %cst_14 {dimension_numbers = #tpu.dot_dimension_numbers<[1], [0], [0], [1], [0, 0, 1, 1], [], []>} : vector<128x256xf32>, vector<256x128xf32>, vector<128x128xf32> -> vector<128x128xf32>
    %25 = vector.extract_strided_slice %24 {offsets = [0, 0], sizes = [128, 10], strides = [1, 1]} : vector<128x128xf32> to vector<128x10xf32>
    %c0_15 = arith.constant 0 : index
    %c0_16 = arith.constant 0 : index
    %26 = vector.load %arg5[%c0_15, %c0_16] : memref<128x10xf32, #tpu.memory_space<vmem>>, vector<128x10xf32>
    tpu.vector_store %arg5[%c0_15, %c0_16], %25 {strides = array<i32>} : memref<128x10xf32, #tpu.memory_space<vmem>>, vector<128x10xf32>,
    return
  }
  func.func @transform_0(%arg0: i32) -> (i32, i32) {
    %c0_i32 = arith.constant 0 : i32
    %c0_i32_0 = arith.constant 0 : i32
    return %arg0, %c0_i32 : i32, i32
  }
  func.func @transform_1(%arg0: i32) -> (i32, i32) {
    %c0_i32 = arith.constant 0 : i32
    %c0_i32_0 = arith.constant 0 : i32
    %c0_i32_1 = arith.constant 0 : i32
    return %c0_i32, %c0_i32_0 : i32, i32
  }
  func.func @transform_2(%arg0: i32) -> (i32, i32) {
    %c0_i32 = arith.constant 0 : i32
    %c0_i32_0 = arith.constant 0 : i32
    %c0_i32_1 = arith.constant 0 : i32
    return %c0_i32, %c0_i32_0 : i32, i32
  }
  func.func @transform_3(%arg0: i32) -> (i32, i32) {
    %c0_i32 = arith.constant 0 : i32
    %c0_i32_0 = arith.constant 0 : i32
    %c0_i32_1 = arith.constant 0 : i32
    return %c0_i32, %c0_i32_0 : i32, i32
  }
  func.func @transform_4(%arg0: i32) -> (i32, i32) {
    %c0_i32 = arith.constant 0 : i32
    %c0_i32_0 = arith.constant 0 : i32
    return %arg0, %c0_i32 : i32, i32
  }
}

</mosaic_0001>

<llo_original>
// kernel: sketch_network_forward.1
$region0: #{sketch_network_forward.1}
  #allocation0 [shape = 'u32[]', space=smem, size = 0x4, offset = 0x4, fixed_abs, tag = 'smem constant byte address 0x4 - core index']
  #allocation1 [shape = 'u32[144,128]{1,0:T(1,128)}', space=vmem, size = 0x12000, scoped, tag = 'internal scratch']
  %s0 = inlined_call_operand.vmem [shape: f32[256,32], index: 0, kind: input, shape index: {}]
  %s1 = inlined_call_operand.hbm [shape: f32[32,64], index: 1, kind: input, shape index: {}]
  %s2 = inlined_call_operand.vmem [shape: bf16[64,256], index: 2, kind: input, shape index: {}]
  %s3 = inlined_call_operand.vmem [shape: f32[256,128], index: 3, kind: input, shape index: {}]
  %s4 = inlined_call_operand.vmem [shape: f32[256,10], index: 4, kind: output, shape index: {}]
  %s5 = sld [smem:[#allocation0]]
  $region53: #{sketch_network_forward.1} parent=0
    _
  %s7 = ssub.s32 1, %s5
  %s8 = scalar_select 0, %s7, %s5
  $region1: #{sketch_network_forward.1} parent=0
    #allocation2 [shape = 'u8[16384]{0}', space=vmem, size = 0x4000, scoped, tag = 'input window, operand 1, single buffered']
    #allocation3 [shape = 's32[2]{0}', space=sflag, size = 0x8, scoped, tag = 'scoped memory for sketch_network_forward.1']
    %9 = vsyncpa [#allocation3], 0
    loop: start=0, step=1, limit=4
    $region2: #{sketch_network_forward.1} parent=1 // loop_pre_header
      _
    $region3: #{sketch_network_forward.1} parent=1 // loop_header
      %s11 = sphi 0, %s15
      %p12 = scmp.ge.s32.totalorder %s11, 4
      %s21 = sphi 0, %s23
      %s24 = sphi 0, %s21
      %s25 = sphi 0, %s24
      %s41 = sphi 0, %s25
      %s45 = sphi 0, %s45
      %s47 = sphi 0, %s45
      %s48 = sphi 0, %s47
      %s62 = sphi 0, %s48
      %s66 = sphi 0, %s66
      %s68 = sphi 0, %s66
      %s69 = sphi 0, %s68
      %s83 = sphi 0, %s69
      %s87 = sphi 0, %s87
      %s89 = sphi 0, %s87
      %s90 = sphi 0, %s89
      %s104 = sphi 0, %s90
      %s110 = sphi 0, %s112
      %s113 = sphi 0, %s110
      %s114 = sphi 0, %s113
      %s130 = sphi 0, %s114
    $region4: #{sketch_network_forward.1} parent=1 // loop_header_branch
      %14 = sbr.rel (%p12) target = $region8
    $region5: #{sketch_network_forward.1} parent=1 // loop_body
      %s16 = ssub.s32 %s11, 1
      %s17 = ssub.s32 %s11, 2
      %s18 = sadd.s32 %s11, 1
      %s19 = ssub.s32 %s11, %s18
      %p20 = scmp.eq.s32.totalorder %s19, 0
      %s22 = sadd.s32 %s21, 1
      %s23 = scalar_select %p20, %s21, %s22
      %p26 = pneg %p20
      %p27 = scmp.eq.s32.totalorder %s11, 1
      %p28 = por %p26, %p27
      %p29 = scmp.ne.s32.totalorder %s21, %s24
      %p30 = scmp.eq.s32.totalorder %s11, 0
      %p31 = por %p29, %p30
      %p32 = scmp.ne.s32.totalorder %s21, %s24
      %p33 = scmp.eq.s32.totalorder %s16, 1
      %p34 = por %p32, %p33
      %p35 = scmp.ne.s32.totalorder %s24, %s25
      %p36 = scmp.eq.s32.totalorder %s16, 0
      %p37 = por %p35, %p36
      %p38 = scmp.ne.s32.totalorder %s24, %s25
      %p39 = scmp.eq.s32.totalorder %s17, 1
      %p40 = por %p38, %p39
      %p42 = scmp.ne.s32.totalorder %s25, %s41
      %p43 = scmp.eq.s32.totalorder %s17, 0
      %p44 = por %p42, %p43
      %s46 = sadd.s32 %s45, 1
      %p49 = scmp.eq.s32.totalorder %s11, 1
      %p50 = scmp.ne.s32.totalorder %s45, %s47
      %p51 = scmp.eq.s32.totalorder %s11, 0
      %p52 = por %p50, %p51
      %p53 = scmp.ne.s32.totalorder %s45, %s47
      %p54 = scmp.eq.s32.totalorder %s16, 1
      %p55 = por %p53, %p54
      %p56 = scmp.ne.s32.totalorder %s47, %s48
      %p57 = scmp.eq.s32.totalorder %s16, 0
      %p58 = por %p56, %p57
      %p59 = scmp.ne.s32.totalorder %s47, %s48
      %p60 = scmp.eq.s32.totalorder %s17, 1
      %p61 = por %p59, %p60
      %p63 = scmp.ne.s32.totalorder %s48, %s62
      %p64 = scmp.eq.s32.totalorder %s17, 0
      %p65 = por %p63, %p64
      %s67 = sadd.s32 %s66, 1
      %p70 = scmp.eq.s32.totalorder %s11, 1
      %p71 = scmp.ne.s32.totalorder %s66, %s68
      %p72 = scmp.eq.s32.totalorder %s11, 0
      %p73 = por %p71, %p72
      %p74 = scmp.ne.s32.totalorder %s66, %s68
      %p75 = scmp.eq.s32.totalorder %s16, 1
      %p76 = por %p74, %p75
      %p77 = scmp.ne.s32.totalorder %s68, %s69
      %p78 = scmp.eq.s32.totalorder %s16, 0
      %p79 = por %p77, %p78
      %p80 = scmp.ne.s32.totalorder %s68, %s69
      %p81 = scmp.eq.s32.totalorder %s17, 1
      %p82 = por %p80, %p81
      %p84 = scmp.ne.s32.totalorder %s69, %s83
      %p85 = scmp.eq.s32.totalorder %s17, 0
      %p86 = por %p84, %p85
      %s88 = sadd.s32 %s87, 1
      %p91 = scmp.eq.s32.totalorder %s11, 1
      %p92 = scmp.ne.s32.totalorder %s87, %s89
      %p93 = scmp.eq.s32.totalorder %s11, 0
      %p94 = por %p92, %p93
      %p95 = scmp.ne.s32.totalorder %s87, %s89
      %p96 = scmp.eq.s32.totalorder %s16, 1
      %p97 = por %p95, %p96
      %p98 = scmp.ne.s32.totalorder %s89, %s90
      %p99 = scmp.eq.s32.totalorder %s16, 0
      %p100 = por %p98, %p99
      %p101 = scmp.ne.s32.totalorder %s89, %s90
      %p102 = scmp.eq.s32.totalorder %s17, 1
      %p103 = por %p101, %p102
      %p105 = scmp.ne.s32.totalorder %s90, %s104
      %p106 = scmp.eq.s32.totalorder %s17, 0
      %p107 = por %p105, %p106
      %s108 = ssub.s32 %s11, %s18
      %p109 = scmp.eq.s32.totalorder %s108, 0
      %s111 = sadd.s32 %s110, 1
      %s112 = scalar_select %p109, %s110, %s111
      %p115 = pneg %p109
      %p116 = scmp.eq.s32.totalorder %s11, 1
      %p117 = por %p115, %p116
      %p118 = scmp.ne.s32.totalorder %s110, %s113
      %p119 = scmp.eq.s32.totalorder %s11, 0
      %p120 = por %p118, %p119
      %p121 = scmp.ne.s32.totalorder %s110, %s113
      %p122 = scmp.eq.s32.totalorder %s16, 1
      %p123 = por %p121, %p122
      %p124 = scmp.ne.s32.totalorder %s113, %s114
      %p125 = scmp.eq.s32.totalorder %s16, 0
      %p126 = por %p124, %p125
      %p127 = scmp.ne.s32.totalorder %s113, %s114
      %p128 = scmp.eq.s32.totalorder %s17, 1
      %p129 = por %p127, %p128
      %p131 = scmp.ne.s32.totalorder %s114, %s130
      %p132 = scmp.eq.s32.totalorder %s17, 0
      %p133 = por %p131, %p132
      %p134 = scmp.le.s32.totalorder 1, %s11
      %p135 = scmp.lt.s32.totalorder %s11, 3
      %p136 = pnand %p134, %p135
      %p137 = pneg %p136
      // Predicated region
      $region9: #{sketch_network_forward.1} parent=5 // pred_check
        _
      $region10: #{sketch_network_forward.1} parent=5 // pred_check_branch
        %139 = sbr.rel (%p136) target = $region12
      $region11: #{sketch_network_forward.1} parent=5 // pred_region
        %s140 = ssub.s32 %s11, 1
        // Predicated region
        $region13: #{sketch_network_forward.1} parent=11 // pred_check
          %p141 = pneg %p58
        $region14: #{sketch_network_forward.1} parent=11 // pred_check_branch
          %143 = sbr.rel (%p141) target = $region16
        $region15: #{sketch_network_forward.1} parent=11 // pred_region
          %s145 = ssub.s32 512, 512
          %146 = vsyncadd [#allocation3], %s145
          %s147 = sshll.u32 [#allocation2], 4
          %s148 = int_to_ptr.vmem [resolvable:$true] %s147
          %153 = dma.hbm_to_vmem [thread:$0]  %s1, 512, %s148, [#allocation3], 128, 128, 8
        $region16: #{sketch_network_forward.1} parent=11 // pred_fallthru
          _
        // Predicated region
        $region17: #{sketch_network_forward.1} parent=11 // pred_check
          %p154 = pneg %p79
        $region18: #{sketch_network_forward.1} parent=11 // pred_check_branch
          %156 = sbr.rel (%p154) target = $region20
        $region19: #{sketch_network_forward.1} parent=11 // pred_region
          _
        $region20: #{sketch_network_forward.1} parent=11 // pred_fallthru
          _
        // Predicated region
        $region21: #{sketch_network_forward.1} parent=11 // pred_check
          %p157 = pneg %p100
        $region22: #{sketch_network_forward.1} parent=11 // pred_check_branch
          %159 = sbr.rel (%p157) target = $region24
        $region23: #{sketch_network_forward.1} parent=11 // pred_region
          _
        $region24: #{sketch_network_forward.1} parent=11 // pred_fallthru
          _
      $region12: #{sketch_network_forward.1} parent=5 // pred_fallthru
        _
      %p160 = scmp.lt.s32.totalorder %s11, 2
      // Predicated region
      $region25: #{sketch_network_forward.1} parent=5 // pred_check
        %p161 = pneg %p160
      $region26: #{sketch_network_forward.1} parent=5 // pred_check_branch
        %163 = sbr.rel (%p161) target = $region28
      $region27: #{sketch_network_forward.1} parent=5 // pred_region
        // Predicated region
        $region29: #{sketch_network_forward.1} parent=27 // pred_check
          %p164 = pneg %p31
        $region30: #{sketch_network_forward.1} parent=27 // pred_check_branch
          %166 = sbr.rel (%p164) target = $region32
        $region31: #{sketch_network_forward.1} parent=27 // pred_region
          %s167 = smul.u32 16, %s11
          %p168 = scmp.lt.s32.totalorder %s167, 31
          %s169 = scalar_select %p168, %s167, 31
          %s170 = smul.addr %s169, 8
          %s171 = scalar_lea.vmem %s0, %s170
          %s172 = smul.u32 16, %s11
        $region32: #{sketch_network_forward.1} parent=27 // pred_fallthru
          _
      $region28: #{sketch_network_forward.1} parent=5 // pred_fallthru
        _
      %p173 = scmp.le.s32.totalorder 1, %s11
      %p174 = scmp.lt.s32.totalorder %s11, 3
      %p175 = pnand %p173, %p174
      %p176 = pneg %p175
      // Predicated region
      $region33: #{sketch_network_forward.1} parent=5 // pred_check
        _
      $region34: #{sketch_network_forward.1} parent=5 // pred_check_branch
        %178 = sbr.rel (%p175) target = $region36
      $region35: #{sketch_network_forward.1} parent=5 // pred_region
        %s179 = ssub.s32 %s11, 1
        // Predicated region
        $region37: #{sketch_network_forward.1} parent=35 // pred_check
          %p180 = pneg %p58
        $region38: #{sketch_network_forward.1} parent=35 // pred_check_branch
          %182 = sbr.rel (%p180) target = $region40
        $region39: #{sketch_network_forward.1} parent=35 // pred_region
          %183 = dma.done [#allocation3], 512
        $region40: #{sketch_network_forward.1} parent=35 // pred_fallthru
          _
        %s184 = smul.u32 16, %s16
        %p185 = scmp.lt.s32.totalorder %s184, 31
        %s186 = scalar_select %p185, %s184, 31
        %s187 = smul.addr %s186, 8
        %s188 = scalar_lea.vmem %s0, %s187
        %p189 = pneg %p37
        %p190 = pneg %p34
        %p191 = pneg %p58
        %p192 = pneg %p55
        %p193 = pneg %p79
        %p194 = pneg %p76
        %p195 = pneg %p100
        %p196 = pneg %p97
        %p197 = pneg %p126
        %p198 = pneg %p123
        %s199 = smul.u32 16, %s16
        %p200 = scmp.lt.s32.totalorder %s199, 31
        %s201 = scalar_select %p200, %s199, 31
        %s202 = smul.addr %s201, 8
        %s203 = scalar_lea.vmem %s4, %s202
        %s204 = smul.u32 16, %s16
        %p205 = scmp.lt.s32.totalorder %s204, 31
        %s206 = scalar_select %p205, %s204, 31
        %s207 = smul.addr %s206, 8
        %s208 = scalar_lea.vmem %s0, %s207
        %s209 = smul.u32 16, %s16
        %s210 = smul.u32 16, %s16
        %p211 = scmp.lt.s32.totalorder %s210, 31
        %s212 = scalar_select %p211, %s210, 31
        %s213 = smul.addr %s212, 8
        %s214 = scalar_lea.vmem %s4, %s213
        %s215 = smul.u32 16, %s16
        %v217 = vld [vmem:[%s208] sm:$0xff]
        %v218 = vld [vmem:[%s208 + $0x8] sm:$0xff]
        %v219 = vld [vmem:[%s208 + $0x10] sm:$0xff]
        %v220 = vld [vmem:[%s208 + $0x18] sm:$0xff]
        %v221 = vld [vmem:[%s208 + $0x20] sm:$0xff]
        %v222 = vld [vmem:[%s208 + $0x28] sm:$0xff]
        %v223 = vld [vmem:[%s208 + $0x30] sm:$0xff]
        %v224 = vld [vmem:[%s208 + $0x38] sm:$0xff]
        %v225 = vld [vmem:[%s208 + $0x40] sm:$0xff]
        %v226 = vld [vmem:[%s208 + $0x48] sm:$0xff]
        %v227 = vld [vmem:[%s208 + $0x50] sm:$0xff]
        %v228 = vld [vmem:[%s208 + $0x58] sm:$0xff]
        %v229 = vld [vmem:[%s208 + $0x60] sm:$0xff]
        %v230 = vld [vmem:[%s208 + $0x68] sm:$0xff]
        %v231 = vld [vmem:[%s208 + $0x70] sm:$0xff]
        %v232 = vld [vmem:[%s208 + $0x78] sm:$0xff]
        %v233 = vld [vmem:[#allocation2] sm:$0xff]
        %v234 = vld [vmem:[#allocation2 + $0x8] sm:$0xff]
        %v235 = vld [vmem:[#allocation2 + $0x10] sm:$0xff]
        %v236 = vld [vmem:[#allocation2 + $0x18] sm:$0xff]
        %vm237 = vcmask 261120
        %v239 = vsel %vm237, %v217, 0
        %v242 = vsel %vm237, %v218, 0
        %v245 = vsel %vm237, %v219, 0
        %v248 = vsel %vm237, %v220, 0
        %v251 = vsel %vm237, %v221, 0
        %v254 = vsel %vm237, %v222, 0
        %v257 = vsel %vm237, %v223, 0
        %v260 = vsel %vm237, %v224, 0
        %v263 = vsel %vm237, %v225, 0
        %v266 = vsel %vm237, %v226, 0
        %v269 = vsel %vm237, %v227, 0
        %v272 = vsel %vm237, %v228, 0
        %v275 = vsel %vm237, %v229, 0
        %v278 = vsel %vm237, %v230, 0
        %v281 = vsel %vm237, %v231, 0
        %v284 = vsel %vm237, %v232, 0
        %286 = vmatprep.subr.mxu0 0.0
        %287 = vmatpush1.msra.mxu0 %v233
        %288 = vmatprep.subr.mxu0 0.0
        %289 = vmatpush1.msra.mxu0 %v234
        %290 = vmatprep.subr.mxu0 0.0
        %291 = vmatpush1.msra.mxu0 %v235
        %292 = vmatprep.subr.mxu0 0.0
        %293 = vmatpush1.msra.mxu0 %v236
        %294 = vmatprep.subr.mxu0 0.0
        %295 = vmatpush1.msra.mxu0 0.0
        %296 = vmatprep.subr.mxu0 0.0
        %297 = vmatpush1.msra.mxu0 0.0
        %298 = vmatprep.subr.mxu0 0.0
        %299 = vmatpush1.msra.mxu0 0.0
        %300 = vmatprep.subr.mxu0 0.0
        %301 = vmatpush1.msra.mxu0 0.0
        %302 = vmatprep.subr.mxu0 0.0
        %303 = vmatpush1.msra.mxu0 0.0
        %304 = vmatprep.subr.mxu0 0.0
        %305 = vmatpush1.msra.mxu0 0.0
        %306 = vmatprep.subr.mxu0 0.0
        %307 = vmatpush1.msra.mxu0 0.0
        %308 = vmatprep.subr.mxu0 0.0
        %309 = vmatpush1.msra.mxu0 0.0
        %310 = vmatprep.subr.mxu0 0.0
        %311 = vmatpush1.msra.mxu0 0.0
        %312 = vmatprep.subr.mxu0 0.0
        %313 = vmatpush1.msra.mxu0 0.0
        %314 = vmatprep.subr.mxu0 0.0
        %315 = vmatpush1.msra.mxu0 0.0
        %316 = vmatprep.subr.mxu0 0.0
        %317 = vmatpush1.msra.mxu0 0.0
        %318 = vmatprep.subr.mxu0 0.0
        %319 = vmatpush1.msra.mxu0 0.0
        %320 = vmatprep.subr.mxu0 0.0
        %321 = vmatpush1.msra.mxu0 0.0
        %322 = vmatprep.subr.mxu0 0.0
        %323 = vmatpush1.msra.mxu0 0.0
        %324 = vmatprep.subr.mxu0 0.0
        %325 = vmatpush1.msra.mxu0 0.0
        %326 = vmatprep.subr.mxu0 0.0
        %327 = vmatpush1.msra.mxu0 0.0
        %328 = vmatprep.subr.mxu0 0.0
        %329 = vmatpush1.msra.mxu0 0.0
        %330 = vmatprep.subr.mxu0 0.0
        %331 = vmatpush1.msra.mxu0 0.0
        %332 = vmatprep.subr.mxu0 0.0
        %333 = vmatpush1.msra.mxu0 0.0
        %334 = vmatprep.subr.mxu0 0.0
        %335 = vmatpush1.msra.mxu0 0.0
        %336 = vmatprep.subr.mxu0 0.0
        %337 = vmatpush1.msra.mxu0 0.0
        %338 = vmatprep.subr.mxu0 0.0
        %339 = vmatpush1.msra.mxu0 0.0
        %340 = vmatprep.subr.mxu0 0.0
        %341 = vmatpush1.msra.mxu0 0.0
        %342 = vmatprep.subr.mxu0 0.0
        %343 = vmatpush1.msra.mxu0 0.0
        %344 = vmatprep.subr.mxu0 0.0
        %345 = vmatpush1.msra.mxu0 0.0
        %346 = vmatprep.subr.mxu0 0.0
        %347 = vmatpush1.msra.mxu0 0.0
        %348 = vmatprep.subr.mxu0 0.0
        %349 = vmatpush1.msra.mxu0 0.0
        %350 = vmatprep.mubr.f32.mxu0 0.0
        %351 = vmatmul.mubr.f32.gmra.mrb[0].mxu0 %v239
        %v352 = vpop.f32.mrb[0].mxu0
        %v353 = vadd.f32 0.0, %v352
        %v354 = vpop.f32.mrb[0].mxu0
        %355 = vmatprep.mubr.f32.mxu0 0.0
        %356 = vmatmul.mubr.f32.gmra.mrb[0].mxu0 %v242
        %v357 = vpop.f32.mrb[0].mxu0
        %v358 = vadd.f32 0.0, %v357
        %v359 = vpop.f32.mrb[0].mxu0
        %360 = vmatprep.mubr.f32.mxu0 0.0
        %361 = vmatmul.mubr.f32.gmra.mrb[0].mxu0 %v245
        %v362 = vpop.f32.mrb[0].mxu0
        %v363 = vadd.f32 0.0, %v362
        %v364 = vpop.f32.mrb[0].mxu0
        %365 = vmatprep.mubr.f32.mxu0 0.0
        %366 = vmatmul.mubr.f32.gmra.mrb[0].mxu0 %v248
        %v367 = vpop.f32.mrb[0].mxu0
        %v368 = vadd.f32 0.0, %v367
        %v369 = vpop.f32.mrb[0].mxu0
        %370 = vmatprep.mubr.f32.mxu0 0.0
        %371 = vmatmul.mubr.f32.gmra.mrb[0].mxu0 %v251
        %v372 = vpop.f32.mrb[0].mxu0
        %v373 = vadd.f32 0.0, %v372
        %v374 = vpop.f32.mrb[0].mxu0
        %375 = vmatprep.mubr.f32.mxu0 0.0
        %376 = vmatmul.mubr.f32.gmra.mrb[0].mxu0 %v254
        %v377 = vpop.f32.mrb[0].mxu0
        %v378 = vadd.f32 0.0, %v377
        %v379 = vpop.f32.mrb[0].mxu0
        %380 = vmatprep.mubr.f32.mxu0 0.0
        %381 = vmatmul.mubr.f32.gmra.mrb[0].mxu0 %v257
        %v382 = vpop.f32.mrb[0].mxu0
        %v383 = vadd.f32 0.0, %v382
        %v384 = vpop.f32.mrb[0].mxu0
        %385 = vmatprep.mubr.f32.mxu0 0.0
        %386 = vmatmul.mubr.f32.gmra.mrb[0].mxu0 %v260
        %v387 = vpop.f32.mrb[0].mxu0
        %v388 = vadd.f32 0.0, %v387
        %v389 = vpop.f32.mrb[0].mxu0
        %390 = vmatprep.mubr.f32.mxu0 0.0
        %391 = vmatmul.mubr.f32.gmra.mrb[0].mxu0 %v263
        %v392 = vpop.f32.mrb[0].mxu0
        %v393 = vadd.f32 0.0, %v392
        %v394 = vpop.f32.mrb[0].mxu0
        %395 = vmatprep.mubr.f32.mxu0 0.0
        %396 = vmatmul.mubr.f32.gmra.mrb[0].mxu0 %v266
        %v397 = vpop.f32.mrb[0].mxu0
        %v398 = vadd.f32 0.0, %v397
        %v399 = vpop.f32.mrb[0].mxu0
        %400 = vmatprep.mubr.f32.mxu0 0.0
        %401 = vmatmul.mubr.f32.gmra.mrb[0].mxu0 %v269
        %v402 = vpop.f32.mrb[0].mxu0
        %v403 = vadd.f32 0.0, %v402
        %v404 = vpop.f32.mrb[0].mxu0
        %405 = vmatprep.mubr.f32.mxu0 0.0
        %406 = vmatmul.mubr.f32.gmra.mrb[0].mxu0 %v272
        %v407 = vpop.f32.mrb[0].mxu0
        %v408 = vadd.f32 0.0, %v407
        %v409 = vpop.f32.mrb[0].mxu0
        %410 = vmatprep.mubr.f32.mxu0 0.0
        %411 = vmatmul.mubr.f32.gmra.mrb[0].mxu0 %v275
        %v412 = vpop.f32.mrb[0].mxu0
        %v413 = vadd.f32 0.0, %v412
        %v414 = vpop.f32.mrb[0].mxu0
        %415 = vmatprep.mubr.f32.mxu0 0.0
        %416 = vmatmul.mubr.f32.gmra.mrb[0].mxu0 %v278
        %v417 = vpop.f32.mrb[0].mxu0
        %v418 = vadd.f32 0.0, %v417
        %v419 = vpop.f32.mrb[0].mxu0
        %420 = vmatprep.mubr.f32.mxu0 0.0
        %421 = vmatmul.mubr.f32.gmra.mrb[0].mxu0 %v281
        %v422 = vpop.f32.mrb[0].mxu0
        %v423 = vadd.f32 0.0, %v422
        %v424 = vpop.f32.mrb[0].mxu0
        %425 = vmatprep.mubr.f32.mxu0 0.0
        %426 = vmatmul.mubr.f32.gmra.mrb[0].mxu0 %v284
        %v427 = vpop.f32.mrb[0].mxu0
        %v428 = vadd.f32 0.0, %v427
        %v429 = vpop.f32.mrb[0].mxu0
        %430 = vdwg.mxu0
        %vm431 = vcmp.gt.f32.partialorder %v353, 0.0
        %vm432 = vcmp.gt.f32.partialorder %v358, 0.0
        %vm433 = vcmp.gt.f32.partialorder %v363, 0.0
        %vm434 = vcmp.gt.f32.partialorder %v368, 0.0
        %vm435 = vcmp.gt.f32.partialorder %v373, 0.0
        %vm436 = vcmp.gt.f32.partialorder %v378, 0.0
        %vm437 = vcmp.gt.f32.partialorder %v383, 0.0
        %vm438 = vcmp.gt.f32.partialorder %v388, 0.0
        %vm439 = vcmp.gt.f32.partialorder %v393, 0.0
        %vm440 = vcmp.gt.f32.partialorder %v398, 0.0
        %vm441 = vcmp.gt.f32.partialorder %v403, 0.0
        %vm442 = vcmp.gt.f32.partialorder %v408, 0.0
        %vm443 = vcmp.gt.f32.partialorder %v413, 0.0
        %vm444 = vcmp.gt.f32.partialorder %v418, 0.0
        %vm445 = vcmp.gt.f32.partialorder %v423, 0.0
        %vm446 = vcmp.gt.f32.partialorder %v428, 0.0
        %v447 = vsel %vm431, 1.0, 0.0
        %v448 = vsel %vm432, 1.0, 0.0
        %v449 = vsel %vm433, 1.0, 0.0
        %v450 = vsel %vm434, 1.0, 0.0
        %v451 = vsel %vm435, 1.0, 0.0
        %v452 = vsel %vm436, 1.0, 0.0
        %v453 = vsel %vm437, 1.0, 0.0
        %v454 = vsel %vm438, 1.0, 0.0
        %v455 = vsel %vm439, 1.0, 0.0
        %v456 = vsel %vm440, 1.0, 0.0
        %v457 = vsel %vm441, 1.0, 0.0
        %v458 = vsel %vm442, 1.0, 0.0
        %v459 = vsel %vm443, 1.0, 0.0
        %v460 = vsel %vm444, 1.0, 0.0
        %v461 = vsel %vm445, 1.0, 0.0
        %v462 = vsel %vm446, 1.0, 0.0
        %v463 = vpack.c.bf16 %v448, %v447
        %v464 = vpack.c.bf16 %v450, %v449
        %v465 = vpack.c.bf16 %v452, %v451
        %v466 = vpack.c.bf16 %v454, %v453
        %v467 = vpack.c.bf16 %v456, %v455
        %v468 = vpack.c.bf16 %v458, %v457
        %v469 = vpack.c.bf16 %v460, %v459
        %v470 = vpack.c.bf16 %v462, %v461
        %v471 = vld [vmem:[%s2] sm:$0xff]
        %v472 = vld [vmem:[%s2 + $0x8] sm:$0xff]
        %v473 = vld [vmem:[%s2 + $0x10] sm:$0xff]
        %v474 = vld [vmem:[%s2 + $0x18] sm:$0xff]
        %v475 = vld [vmem:[%s2 + $0x20] sm:$0xff]
        %v476 = vld [vmem:[%s2 + $0x28] sm:$0xff]
        %v477 = vld [vmem:[%s2 + $0x30] sm:$0xff]
        %v478 = vld [vmem:[%s2 + $0x38] sm:$0xff]
        %v487 = vunpack.c.l.b16 %v471
        %v488 = vunpack.c.h.b16 %v471
        %v489 = vunpack.c.l.b16 %v472
        %v490 = vunpack.c.h.b16 %v472
        %v491 = vunpack.c.l.b16 %v473
        %v492 = vunpack.c.h.b16 %v473
        %v493 = vunpack.c.l.b16 %v474
        %v494 = vunpack.c.h.b16 %v474
        %v495 = vunpack.c.l.b16 %v475
        %v496 = vunpack.c.h.b16 %v475
        %v497 = vunpack.c.l.b16 %v476
        %v498 = vunpack.c.h.b16 %v476
        %v499 = vunpack.c.l.b16 %v477
        %v500 = vunpack.c.h.b16 %v477
        %v501 = vunpack.c.l.b16 %v478
        %v502 = vunpack.c.h.b16 %v478
        %v503 = vpack.c.b16 %v489, %v487
        %v504 = vpack.c.b16 %v490, %v488
        %v505 = vpack.c.b16 %v493, %v491
        %v506 = vpack.c.b16 %v494, %v492
        %v507 = vpack.c.b16 %v497, %v495
        %v508 = vpack.c.b16 %v498, %v496
        %v509 = vpack.c.b16 %v501, %v499
        %v510 = vpack.c.b16 %v502, %v500
        %vm519 = vcmask 523264
        %v521 = vsel %vm519, %v463, 0
        %v524 = vsel %vm519, %v464, 0
        %v527 = vsel %vm519, %v465, 0
        %v530 = vsel %vm519, %v466, 0
        %v533 = vsel %vm519, %v467, 0
        %v536 = vsel %vm519, %v468, 0
        %v539 = vsel %vm519, %v469, 0
        %v542 = vsel %vm519, %v470, 0
        %544 = vmatprep.subr.bf16.mxu0 %v504
        %545 = vmatpush1.bf16.msra.mxu0 %v503
        %546 = vmatprep.subr.bf16.mxu0 %v506
        %547 = vmatpush1.bf16.msra.mxu0 %v505
        %548 = vmatprep.subr.bf16.mxu0 %v508
        %549 = vmatpush1.bf16.msra.mxu0 %v507
        %550 = vmatprep.subr.bf16.mxu0 %v510
        %551 = vmatpush1.bf16.msra.mxu0 %v509
        %552 = vmatprep.subr.bf16.mxu0 0
        %553 = vmatpush1.bf16.msra.mxu0 0
        %554 = vmatprep.subr.bf16.mxu0 0
        %555 = vmatpush1.bf16.msra.mxu0 0
        %556 = vmatprep.subr.bf16.mxu0 0
        %557 = vmatpush1.bf16.msra.mxu0 0
        %558 = vmatprep.subr.bf16.mxu0 0
        %559 = vmatpush1.bf16.msra.mxu0 0
        %560 = vmatprep.subr.bf16.mxu0 0
        %561 = vmatpush1.bf16.msra.mxu0 0
        %562 = vmatprep.subr.bf16.mxu0 0
        %563 = vmatpush1.bf16.msra.mxu0 0
        %564 = vmatprep.subr.bf16.mxu0 0
        %565 = vmatpush1.bf16.msra.mxu0 0
        %566 = vmatprep.subr.bf16.mxu0 0
        %567 = vmatpush1.bf16.msra.mxu0 0
        %568 = vmatprep.subr.bf16.mxu0 0
        %569 = vmatpush1.bf16.msra.mxu0 0
        %570 = vmatprep.subr.bf16.mxu0 0
        %571 = vmatpush1.bf16.msra.mxu0 0
        %572 = vmatprep.subr.bf16.mxu0 0
        %573 = vmatpush1.bf16.msra.mxu0 0
        %574 = vmatprep.subr.bf16.mxu0 0
        %575 = vmatpush1.bf16.msra.mxu0 0
        %576 = vmatprep.mubr.bf16.mxu0 0
        %577 = vmatmul.mubr.bf16.gmra.mrb[0].mxu0 %v521
        %v578 = vpop.f32.mrb[0].mxu0
        %v579 = vadd.f32 0.0, %v578
        %v580 = vpop.f32.mrb[0].mxu0
        %v581 = vadd.f32 0.0, %v580
        %v582 = vpop.f32.mrb[0].mxu0
        %v583 = vadd.f32 0.0, %v582
        %v584 = vpop.f32.mrb[0].mxu0
        %v585 = vadd.f32 0.0, %v584
        %586 = vmatprep.mubr.bf16.mxu0 0
        %587 = vmatmul.mubr.bf16.gmra.mrb[0].mxu0 %v524
        %v588 = vpop.f32.mrb[0].mxu0
        %v589 = vadd.f32 0.0, %v588
        %v590 = vpop.f32.mrb[0].mxu0
        %v591 = vadd.f32 0.0, %v590
        %v592 = vpop.f32.mrb[0].mxu0
        %v593 = vadd.f32 0.0, %v592
        %v594 = vpop.f32.mrb[0].mxu0
        %v595 = vadd.f32 0.0, %v594
        %596 = vmatprep.mubr.bf16.mxu0 0
        %597 = vmatmul.mubr.bf16.gmra.mrb[0].mxu0 %v527
        %v598 = vpop.f32.mrb[0].mxu0
        %v599 = vadd.f32 0.0, %v598
        %v600 = vpop.f32.mrb[0].mxu0
        %v601 = vadd.f32 0.0, %v600
        %v602 = vpop.f32.mrb[0].mxu0
        %v603 = vadd.f32 0.0, %v602
        %v604 = vpop.f32.mrb[0].mxu0
        %v605 = vadd.f32 0.0, %v604
        %606 = vmatprep.mubr.bf16.mxu0 0
        %607 = vmatmul.mubr.bf16.gmra.mrb[0].mxu0 %v530
        %v608 = vpop.f32.mrb[0].mxu0
        %v609 = vadd.f32 0.0, %v608
        %v610 = vpop.f32.mrb[0].mxu0
        %v611 = vadd.f32 0.0, %v610
        %v612 = vpop.f32.mrb[0].mxu0
        %v613 = vadd.f32 0.0, %v612
        %v614 = vpop.f32.mrb[0].mxu0
        %v615 = vadd.f32 0.0, %v614
        %616 = vmatprep.mubr.bf16.mxu0 0
        %617 = vmatmul.mubr.bf16.gmra.mrb[0].mxu0 %v533
        %v618 = vpop.f32.mrb[0].mxu0
        %v619 = vadd.f32 0.0, %v618
        %v620 = vpop.f32.mrb[0].mxu0
        %v621 = vadd.f32 0.0, %v620
        %v622 = vpop.f32.mrb[0].mxu0
        %v623 = vadd.f32 0.0, %v622
        %v624 = vpop.f32.mrb[0].mxu0
        %v625 = vadd.f32 0.0, %v624
        %626 = vmatprep.mubr.bf16.mxu0 0
        %627 = vmatmul.mubr.bf16.gmra.mrb[0].mxu0 %v536
        %v628 = vpop.f32.mrb[0].mxu0
        %v629 = vadd.f32 0.0, %v628
        %v630 = vpop.f32.mrb[0].mxu0
        %v631 = vadd.f32 0.0, %v630
        %v632 = vpop.f32.mrb[0].mxu0
        %v633 = vadd.f32 0.0, %v632
        %v634 = vpop.f32.mrb[0].mxu0
        %v635 = vadd.f32 0.0, %v634
        %636 = vmatprep.mubr.bf16.mxu0 0
        %637 = vmatmul.mubr.bf16.gmra.mrb[0].mxu0 %v539
        %v638 = vpop.f32.mrb[0].mxu0
        %v639 = vadd.f32 0.0, %v638
        %v640 = vpop.f32.mrb[0].mxu0
        %v641 = vadd.f32 0.0, %v640
        %v642 = vpop.f32.mrb[0].mxu0
        %v643 = vadd.f32 0.0, %v642
        %v644 = vpop.f32.mrb[0].mxu0
        %v645 = vadd.f32 0.0, %v644
        %646 = vmatprep.mubr.bf16.mxu0 0
        %647 = vmatmul.mubr.bf16.gmra.mrb[0].mxu0 %v542
        %v648 = vpop.f32.mrb[0].mxu0
        %v649 = vadd.f32 0.0, %v648
        %v650 = vpop.f32.mrb[0].mxu0
        %v651 = vadd.f32 0.0, %v650
        %v652 = vpop.f32.mrb[0].mxu0
        %v653 = vadd.f32 0.0, %v652
        %v654 = vpop.f32.mrb[0].mxu0
        %v655 = vadd.f32 0.0, %v654
        %656 = vdwg.mxu0
        %v657 = vlaneseq
        %v658 = vand.u32 %v657, 127
        %v659 = vadd.s32 %v658, 128
        %v660 = vand.u32 %v658, 15
        %v661 = vand.u32 %v659, 15
        %v662 = vcvt.s32.f32 %v660
        %v663 = vcvt.s32.f32 %v661
        %v664 = vsub.f32 %v579, %v662
        %v665 = vsub.f32 %v581, %v663
        %v666 = vsub.f32 %v583, %v662
        %v667 = vsub.f32 %v585, %v663
        %v668 = vsub.f32 %v589, %v662
        %v669 = vsub.f32 %v591, %v663
        %v670 = vsub.f32 %v593, %v662
        %v671 = vsub.f32 %v595, %v663
        %v672 = vsub.f32 %v599, %v662
        %v673 = vsub.f32 %v601, %v663
        %v674 = vsub.f32 %v603, %v662
        %v675 = vsub.f32 %v605, %v663
        %v676 = vsub.f32 %v609, %v662
        %v677 = vsub.f32 %v611, %v663
        %v678 = vsub.f32 %v613, %v662
        %v679 = vsub.f32 %v615, %v663
        %v680 = vsub.f32 %v619, %v662
        %v681 = vsub.f32 %v621, %v663
        %v682 = vsub.f32 %v623, %v662
        %v683 = vsub.f32 %v625, %v663
        %v684 = vsub.f32 %v629, %v662
        %v685 = vsub.f32 %v631, %v663
        %v686 = vsub.f32 %v633, %v662
        %v687 = vsub.f32 %v635, %v663
        %v688 = vsub.f32 %v639, %v662
        %v689 = vsub.f32 %v641, %v663
        %v690 = vsub.f32 %v643, %v662
        %v691 = vsub.f32 %v645, %v663
        %v692 = vsub.f32 %v649, %v662
        %v693 = vsub.f32 %v651, %v663
        %v694 = vsub.f32 %v653, %v662
        %v695 = vsub.f32 %v655, %v663
        %v696 = vand.u32 2147483647, %v664
        %v697 = vand.u32 2147483647, %v665
        %v698 = vand.u32 2147483647, %v666
        %v699 = vand.u32 2147483647, %v667
        %v700 = vand.u32 2147483647, %v668
        %v701 = vand.u32 2147483647, %v669
        %v702 = vand.u32 2147483647, %v670
        %v703 = vand.u32 2147483647, %v671
        %v704 = vand.u32 2147483647, %v672
        %v705 = vand.u32 2147483647, %v673
        %v706 = vand.u32 2147483647, %v674
        %v707 = vand.u32 2147483647, %v675
        %v708 = vand.u32 2147483647, %v676
        %v709 = vand.u32 2147483647, %v677
        %v710 = vand.u32 2147483647, %v678
        %v711 = vand.u32 2147483647, %v679
        %v712 = vand.u32 2147483647, %v680
        %v713 = vand.u32 2147483647, %v681
        %v714 = vand.u32 2147483647, %v682
        %v715 = vand.u32 2147483647, %v683
        %v716 = vand.u32 2147483647, %v684
        %v717 = vand.u32 2147483647, %v685
        %v718 = vand.u32 2147483647, %v686
        %v719 = vand.u32 2147483647, %v687
        %v720 = vand.u32 2147483647, %v688
        %v721 = vand.u32 2147483647, %v689
        %v722 = vand.u32 2147483647, %v690
        %v723 = vand.u32 2147483647, %v691
        %v724 = vand.u32 2147483647, %v692
        %v725 = vand.u32 2147483647, %v693
        %v726 = vand.u32 2147483647, %v694
        %v727 = vand.u32 2147483647, %v695
        %vm728 = vcmp.lt.f32.partialorder %v696, 0.5
        %vm729 = vcmp.lt.f32.partialorder %v697, 0.5
        %vm730 = vcmp.lt.f32.partialorder %v698, 0.5
        %vm731 = vcmp.lt.f32.partialorder %v699, 0.5
        %vm732 = vcmp.lt.f32.partialorder %v700, 0.5
        %vm733 = vcmp.lt.f32.partialorder %v701, 0.5
        %vm734 = vcmp.lt.f32.partialorder %v702, 0.5
        %vm735 = vcmp.lt.f32.partialorder %v703, 0.5
        %vm736 = vcmp.lt.f32.partialorder %v704, 0.5
        %vm737 = vcmp.lt.f32.partialorder %v705, 0.5
        %vm738 = vcmp.lt.f32.partialorder %v706, 0.5
        %vm739 = vcmp.lt.f32.partialorder %v707, 0.5
        %vm740 = vcmp.lt.f32.partialorder %v708, 0.5
        %vm741 = vcmp.lt.f32.partialorder %v709, 0.5
        %vm742 = vcmp.lt.f32.partialorder %v710, 0.5
        %vm743 = vcmp.lt.f32.partialorder %v711, 0.5
        %vm744 = vcmp.lt.f32.partialorder %v712, 0.5
        %vm745 = vcmp.lt.f32.partialorder %v713, 0.5
        %vm746 = vcmp.lt.f32.partialorder %v714, 0.5
        %vm747 = vcmp.lt.f32.partialorder %v715, 0.5
        %vm748 = vcmp.lt.f32.partialorder %v716, 0.5
        %vm749 = vcmp.lt.f32.partialorder %v717, 0.5
        %vm750 = vcmp.lt.f32.partialorder %v718, 0.5
        %vm751 = vcmp.lt.f32.partialorder %v719, 0.5
        %vm752 = vcmp.lt.f32.partialorder %v720, 0.5
        %vm753 = vcmp.lt.f32.partialorder %v721, 0.5
        %vm754 = vcmp.lt.f32.partialorder %v722, 0.5
        %vm755 = vcmp.lt.f32.partialorder %v723, 0.5
        %vm756 = vcmp.lt.f32.partialorder %v724, 0.5
        %vm757 = vcmp.lt.f32.partialorder %v725, 0.5
        %vm758 = vcmp.lt.f32.partialorder %v726, 0.5
        %vm759 = vcmp.lt.f32.partialorder %v727, 0.5
        %v760 = vsel %vm728, 1.0, 0.0
        %v761 = vsel %vm729, 1.0, 0.0
        %v762 = vsel %vm730, 1.0, 0.0
        %v763 = vsel %vm731, 1.0, 0.0
        %v764 = vsel %vm732, 1.0, 0.0
        %v765 = vsel %vm733, 1.0, 0.0
        %v766 = vsel %vm734, 1.0, 0.0
        %v767 = vsel %vm735, 1.0, 0.0
        %v768 = vsel %vm736, 1.0, 0.0
        %v769 = vsel %vm737, 1.0, 0.0
        %v770 = vsel %vm738, 1.0, 0.0
        %v771 = vsel %vm739, 1.0, 0.0
        %v772 = vsel %vm740, 1.0, 0.0
        %v773 = vsel %vm741, 1.0, 0.0
        %v774 = vsel %vm742, 1.0, 0.0
        %v775 = vsel %vm743, 1.0, 0.0
        %v776 = vsel %vm744, 1.0, 0.0
        %v777 = vsel %vm745, 1.0, 0.0
        %v778 = vsel %vm746, 1.0, 0.0
        %v779 = vsel %vm747, 1.0, 0.0
        %v780 = vsel %vm748, 1.0, 0.0
        %v781 = vsel %vm749, 1.0, 0.0
        %v782 = vsel %vm750, 1.0, 0.0
        %v783 = vsel %vm751, 1.0, 0.0
        %v784 = vsel %vm752, 1.0, 0.0
        %v785 = vsel %vm753, 1.0, 0.0
        %v786 = vsel %vm754, 1.0, 0.0
        %v787 = vsel %vm755, 1.0, 0.0
        %v788 = vsel %vm756, 1.0, 0.0
        %v789 = vsel %vm757, 1.0, 0.0
        %v790 = vsel %vm758, 1.0, 0.0
        %v791 = vsel %vm759, 1.0, 0.0
        %v792 = vld [vmem:[%s3] sm:$0xff]
        %v793 = vld [vmem:[%s3 + $0x8] sm:$0xff]
        %v794 = vld [vmem:[%s3 + $0x10] sm:$0xff]
        %v795 = vld [vmem:[%s3 + $0x18] sm:$0xff]
        %v796 = vld [vmem:[%s3 + $0x20] sm:$0xff]
        %v797 = vld [vmem:[%s3 + $0x28] sm:$0xff]
        %v798 = vld [vmem:[%s3 + $0x30] sm:$0xff]
        %v799 = vld [vmem:[%s3 + $0x38] sm:$0xff]
        %v800 = vld [vmem:[%s3 + $0x40] sm:$0xff]
        %v801 = vld [vmem:[%s3 + $0x48] sm:$0xff]
        %v802 = vld [vmem:[%s3 + $0x50] sm:$0xff]
        %v803 = vld [vmem:[%s3 + $0x58] sm:$0xff]
        %v804 = vld [vmem:[%s3 + $0x60] sm:$0xff]
        %v805 = vld [vmem:[%s3 + $0x68] sm:$0xff]
        %v806 = vld [vmem:[%s3 + $0x70] sm:$0xff]
        %v807 = vld [vmem:[%s3 + $0x78] sm:$0xff]
        %v808 = vld [vmem:[%s3 + $0x80] sm:$0xff]
        %v809 = vld [vmem:[%s3 + $0x88] sm:$0xff]
        %v810 = vld [vmem:[%s3 + $0x90] sm:$0xff]
        %v811 = vld [vmem:[%s3 + $0x98] sm:$0xff]
        %v812 = vld [vmem:[%s3 + $0xa0] sm:$0xff]
        %v813 = vld [vmem:[%s3 + $0xa8] sm:$0xff]
        %v814 = vld [vmem:[%s3 + $0xb0] sm:$0xff]
        %v815 = vld [vmem:[%s3 + $0xb8] sm:$0xff]
        %v816 = vld [vmem:[%s3 + $0xc0] sm:$0xff]
        %v817 = vld [vmem:[%s3 + $0xc8] sm:$0xff]
        %v818 = vld [vmem:[%s3 + $0xd0] sm:$0xff]
        %v819 = vld [vmem:[%s3 + $0xd8] sm:$0xff]
        %v820 = vld [vmem:[%s3 + $0xe0] sm:$0xff]
        %v821 = vld [vmem:[%s3 + $0xe8] sm:$0xff]
        %v822 = vld [vmem:[%s3 + $0xf0] sm:$0xff]
        %v823 = vld [vmem:[%s3 + $0xf8] sm:$0xff]
        %824 = vmatprep.subr.mxu0 0.0
        %825 = vmatpush1.msra.mxu0 %v792
        %826 = vmatprep.subr.mxu0 0.0
        %827 = vmatpush1.msra.mxu0 %v793
        %828 = vmatprep.subr.mxu0 0.0
        %829 = vmatpush1.msra.mxu0 %v794
        %830 = vmatprep.subr.mxu0 0.0
        %831 = vmatpush1.msra.mxu0 %v795
        %832 = vmatprep.subr.mxu0 0.0
        %833 = vmatpush1.msra.mxu0 %v796
        %834 = vmatprep.subr.mxu0 0.0
        %835 = vmatpush1.msra.mxu0 %v797
        %836 = vmatprep.subr.mxu0 0.0
        %837 = vmatpush1.msra.mxu0 %v798
        %838 = vmatprep.subr.mxu0 0.0
        %839 = vmatpush1.msra.mxu0 %v799
        %840 = vmatprep.subr.mxu0 0.0
        %841 = vmatpush1.msra.mxu0 %v800
        %842 = vmatprep.subr.mxu0 0.0
        %843 = vmatpush1.msra.mxu0 %v801
        %844 = vmatprep.subr.mxu0 0.0
        %845 = vmatpush1.msra.mxu0 %v802
        %846 = vmatprep.subr.mxu0 0.0
        %847 = vmatpush1.msra.mxu0 %v803
        %848 = vmatprep.subr.mxu0 0.0
        %849 = vmatpush1.msra.mxu0 %v804
        %850 = vmatprep.subr.mxu0 0.0
        %851 = vmatpush1.msra.mxu0 %v805
        %852 = vmatprep.subr.mxu0 0.0
        %853 = vmatpush1.msra.mxu0 %v806
        %854 = vmatprep.subr.mxu0 0.0
        %855 = vmatpush1.msra.mxu0 %v807
        %856 = vmatprep.subr.mxu0 0.0
        %857 = vmatpush1.msra.mxu0 %v808
        %858 = vmatprep.subr.mxu0 0.0
        %859 = vmatpush1.msra.mxu0 %v809
        %860 = vmatprep.subr.mxu0 0.0
        %861 = vmatpush1.msra.mxu0 %v810
        %862 = vmatprep.subr.mxu0 0.0
        %863 = vmatpush1.msra.mxu0 %v811
        %864 = vmatprep.subr.mxu0 0.0
        %865 = vmatpush1.msra.mxu0 %v812
        %866 = vmatprep.subr.mxu0 0.0
        %867 = vmatpush1.msra.mxu0 %v813
        %868 = vmatprep.subr.mxu0 0.0
        %869 = vmatpush1.msra.mxu0 %v814
        %870 = vmatprep.subr.mxu0 0.0
        %871 = vmatpush1.msra.mxu0 %v815
        %872 = vmatprep.subr.mxu0 0.0
        %873 = vmatpush1.msra.mxu0 %v816
        %874 = vmatprep.subr.mxu0 0.0
        %875 = vmatpush1.msra.mxu0 %v817
        %876 = vmatprep.subr.mxu0 0.0
        %877 = vmatpush1.msra.mxu0 %v818
        %878 = vmatprep.subr.mxu0 0.0
        %879 = vmatpush1.msra.mxu0 %v819
        %880 = vmatprep.subr.mxu0 0.0
        %881 = vmatpush1.msra.mxu0 %v820
        %882 = vmatprep.subr.mxu0 0.0
        %883 = vmatpush1.msra.mxu0 %v821
        %884 = vmatprep.subr.mxu0 0.0
        %885 = vmatpush1.msra.mxu0 %v822
        %886 = vmatprep.subr.mxu0 0.0
        %887 = vmatpush1.msra.mxu0 %v823
        %888 = vmatprep.mubr.f32.mxu0 %v761
        %889 = vmatmul.mubr.f32.gmra.mrb[0].mxu0 %v760
        %v890 = vpop.f32.mrb[0].mxu0
        %v891 = vadd.f32 0.0, %v890
        %v892 = vpop.f32.mrb[0].mxu0
        %893 = vmatprep.mubr.f32.mxu0 %v763
        %894 = vmatmul.mubr.f32.gmra.mrb[0].mxu0 %v762
        %v895 = vpop.f32.mrb[0].mxu0
        %v896 = vadd.f32 0.0, %v895
        %v897 = vpop.f32.mrb[0].mxu0
        %898 = vmatprep.mubr.f32.mxu0 %v765
        %899 = vmatmul.mubr.f32.gmra.mrb[0].mxu0 %v764
        %v900 = vpop.f32.mrb[0].mxu0
        %v901 = vadd.f32 0.0, %v900
        %v902 = vpop.f32.mrb[0].mxu0
        %903 = vmatprep.mubr.f32.mxu0 %v767
        %904 = vmatmul.mubr.f32.gmra.mrb[0].mxu0 %v766
        %v905 = vpop.f32.mrb[0].mxu0
        %v906 = vadd.f32 0.0, %v905
        %v907 = vpop.f32.mrb[0].mxu0
        %908 = vmatprep.mubr.f32.mxu0 %v769
        %909 = vmatmul.mubr.f32.gmra.mrb[0].mxu0 %v768
        %v910 = vpop.f32.mrb[0].mxu0
        %v911 = vadd.f32 0.0, %v910
        %v912 = vpop.f32.mrb[0].mxu0
        %913 = vmatprep.mubr.f32.mxu0 %v771
        %914 = vmatmul.mubr.f32.gmra.mrb[0].mxu0 %v770
        %v915 = vpop.f32.mrb[0].mxu0
        %v916 = vadd.f32 0.0, %v915
        %v917 = vpop.f32.mrb[0].mxu0
        %918 = vmatprep.mubr.f32.mxu0 %v773
        %919 = vmatmul.mubr.f32.gmra.mrb[0].mxu0 %v772
        %v920 = vpop.f32.mrb[0].mxu0
        %v921 = vadd.f32 0.0, %v920
        %v922 = vpop.f32.mrb[0].mxu0
        %923 = vmatprep.mubr.f32.mxu0 %v775
        %924 = vmatmul.mubr.f32.gmra.mrb[0].mxu0 %v774
        %v925 = vpop.f32.mrb[0].mxu0
        %v926 = vadd.f32 0.0, %v925
        %v927 = vpop.f32.mrb[0].mxu0
        %928 = vmatprep.mubr.f32.mxu0 %v777
        %929 = vmatmul.mubr.f32.gmra.mrb[0].mxu0 %v776
        %v930 = vpop.f32.mrb[0].mxu0
        %v931 = vadd.f32 0.0, %v930
        %v932 = vpop.f32.mrb[0].mxu0
        %933 = vmatprep.mubr.f32.mxu0 %v779
        %934 = vmatmul.mubr.f32.gmra.mrb[0].mxu0 %v778
        %v935 = vpop.f32.mrb[0].mxu0
        %v936 = vadd.f32 0.0, %v935
        %v937 = vpop.f32.mrb[0].mxu0
        %938 = vmatprep.mubr.f32.mxu0 %v781
        %939 = vmatmul.mubr.f32.gmra.mrb[0].mxu0 %v780
        %v940 = vpop.f32.mrb[0].mxu0
        %v941 = vadd.f32 0.0, %v940
        %v942 = vpop.f32.mrb[0].mxu0
        %943 = vmatprep.mubr.f32.mxu0 %v783
        %944 = vmatmul.mubr.f32.gmra.mrb[0].mxu0 %v782
        %v945 = vpop.f32.mrb[0].mxu0
        %v946 = vadd.f32 0.0, %v945
        %v947 = vpop.f32.mrb[0].mxu0
        %948 = vmatprep.mubr.f32.mxu0 %v785
        %949 = vmatmul.mubr.f32.gmra.mrb[0].mxu0 %v784
        %v950 = vpop.f32.mrb[0].mxu0
        %v951 = vadd.f32 0.0, %v950
        %v952 = vpop.f32.mrb[0].mxu0
        %953 = vmatprep.mubr.f32.mxu0 %v787
        %954 = vmatmul.mubr.f32.gmra.mrb[0].mxu0 %v786
        %v955 = vpop.f32.mrb[0].mxu0
        %v956 = vadd.f32 0.0, %v955
        %v957 = vpop.f32.mrb[0].mxu0
        %958 = vmatprep.mubr.f32.mxu0 %v789
        %959 = vmatmul.mubr.f32.gmra.mrb[0].mxu0 %v788
        %v960 = vpop.f32.mrb[0].mxu0
        %v961 = vadd.f32 0.0, %v960
        %v962 = vpop.f32.mrb[0].mxu0
        %963 = vmatprep.mubr.f32.mxu0 %v791
        %964 = vmatmul.mubr.f32.gmra.mrb[0].mxu0 %v790
        %v965 = vpop.f32.mrb[0].mxu0
        %v966 = vadd.f32 0.0, %v965
        %v967 = vpop.f32.mrb[0].mxu0
        %968 = vdwg.mxu0
        %vm969 = vcmask 80896
        %970 = vst.msk [vmem:[%s214] sm:$0xff] %vm969, %v891
        %971 = vst.msk [vmem:[%s214 + $0x8] sm:$0xff] %vm969, %v896
        %972 = vst.msk [vmem:[%s214 + $0x10] sm:$0xff] %vm969, %v901
        %973 = vst.msk [vmem:[%s214 + $0x18] sm:$0xff] %vm969, %v906
        %974 = vst.msk [vmem:[%s214 + $0x20] sm:$0xff] %vm969, %v911
        %975 = vst.msk [vmem:[%s214 + $0x28] sm:$0xff] %vm969, %v916
        %976 = vst.msk [vmem:[%s214 + $0x30] sm:$0xff] %vm969, %v921
        %977 = vst.msk [vmem:[%s214 + $0x38] sm:$0xff] %vm969, %v926
        %978 = vst.msk [vmem:[%s214 + $0x40] sm:$0xff] %vm969, %v931
        %979 = vst.msk [vmem:[%s214 + $0x48] sm:$0xff] %vm969, %v936
        %980 = vst.msk [vmem:[%s214 + $0x50] sm:$0xff] %vm969, %v941
        %981 = vst.msk [vmem:[%s214 + $0x58] sm:$0xff] %vm969, %v946
        %982 = vst.msk [vmem:[%s214 + $0x60] sm:$0xff] %vm969, %v951
        %983 = vst.msk [vmem:[%s214 + $0x68] sm:$0xff] %vm969, %v956
        %984 = vst.msk [vmem:[%s214 + $0x70] sm:$0xff] %vm969, %v961
        %985 = vst.msk [vmem:[%s214 + $0x78] sm:$0xff] %vm969, %v966
        %s986 = smul.u32 16, %s16
        %p987 = scmp.lt.s32.totalorder %s986, 31
        %s988 = scalar_select %p987, %s986, 31
        %s989 = smul.addr %s988, 8
        %s990 = scalar_lea.vmem %s4, %s989
        // Predicated region
        $region41: #{sketch_network_forward.1} parent=35 // pred_check
          %p991 = pneg %p123
        $region42: #{sketch_network_forward.1} parent=35 // pred_check_branch
          %993 = sbr.rel (%p991) target = $region44
        $region43: #{sketch_network_forward.1} parent=35 // pred_region
          %s994 = smul.u32 16, %s16
        $region44: #{sketch_network_forward.1} parent=35 // pred_fallthru
          _
      $region36: #{sketch_network_forward.1} parent=5 // pred_fallthru
        _
      %p995 = scmp.le.s32.totalorder 2, %s11
      // Predicated region
      $region45: #{sketch_network_forward.1} parent=5 // pred_check
        %p996 = pneg %p995
      $region46: #{sketch_network_forward.1} parent=5 // pred_check_branch
        %998 = sbr.rel (%p996) target = $region48
      $region47: #{sketch_network_forward.1} parent=5 // pred_region
        %s999 = ssub.s32 %s11, 2
        // Predicated region
        $region49: #{sketch_network_forward.1} parent=47 // pred_check
          %p1000 = pneg %p129
        $region50: #{sketch_network_forward.1} parent=47 // pred_check_branch
          %1002 = sbr.rel (%p1000) target = $region52
        $region51: #{sketch_network_forward.1} parent=47 // pred_region
          %s1003 = smul.u32 16, %s17
          %p1004 = scmp.lt.s32.totalorder %s1003, 31
          %s1005 = scalar_select %p1004, %s1003, 31
          %s1006 = smul.addr %s1005, 8
          %s1007 = scalar_lea.vmem %s4, %s1006
        $region52: #{sketch_network_forward.1} parent=47 // pred_fallthru
          _
      $region48: #{sketch_network_forward.1} parent=5 // pred_fallthru
        _
    $region6: #{sketch_network_forward.1} parent=1 // loop_footer
      %s15 = sadd.s32 1, %s11
    $region7: #{sketch_network_forward.1} parent=1 // loop_footer_branch
      %10 = sbr.rel target = $region3
    $region8: #{sketch_network_forward.1} parent=1 // loop_exit
      _
    %1008 = vsyncpa [#allocation3], 1
    %s1009 = scalar_lea.sflag [#allocation3], 1
    %1010 = vsyncpa %s1009, 1

</llo_original>
